<compile_context>
chip_gen: v7x
topology: tpu7x:2x2x1
jax: 0.10.0
libtpu: 0.0.40
codegen_flags: <defaults>
</compile_context>

<pallas_src>
import functools
import numpy as np

import jax
import jax.numpy as jnp
from jax.experimental import pallas as pl
from jax.experimental.pallas import tpu as pltpu


# ---------------------------------------------------------------------------
# Static tap tables (pure Python / numpy, evaluated at trace time).
# ---------------------------------------------------------------------------
# Branch 0: ordinary 3x3 depthwise taps; weight column index = kh*3 + kw.
_B0_TAPS = [(kh, kw) for kh in range(3) for kw in range(3)]


def _axis_combos():
    """Distinct (phase_flip, coarse_offset) pairs realized by (out_phase, k)."""
    combos = []
    for p in (0, 1):
        for k in (0, 1, 2):
            fd = ((k + 1) % 2, (p + k - 1) // 2)   # flip iff k != 1; floor offset
            if fd not in combos:
                combos.append(fd)
    return combos


_AXIS_COMBOS = _axis_combos()                      # [(1,-1), (0,0), (1,0), (1,1)]
# Branch 1 generalized taps: (flip_h, dh, flip_w, dw)  -- 16 of them.
_B1_TAPS = [(fh, dh, fw, dw) for (fh, dh) in _AXIS_COMBOS for (fw, dw) in _AXIS_COMBOS]


def _find_k(phase, flip, off):
    for k in range(3):
        if (k + 1) % 2 == flip and (phase + k - 1) // 2 == off:
            return k
    return None


def _build_branch1_weights(w1):
    """Pack w1 (2,3,3) into an (8,16) per-output-channel / per-tap table."""
    nt = len(_B1_TAPS)
    ci = np.zeros((8, nt), np.int32)
    khi = np.zeros((8, nt), np.int32)
    kwi = np.zeros((8, nt), np.int32)
    val = np.zeros((8, nt), np.float32)
    for c in range(8):                              # c = 4*p + 2*q + d
        p, q, d = (c >> 2) & 1, (c >> 1) & 1, c & 1
        for t, (fh, dh, fw, dw) in enumerate(_B1_TAPS):
            kh = _find_k(p, fh, dh)
            kw = _find_k(q, fw, dw)
            if kh is not None and kw is not None:
                ci[c, t], khi[c, t], kwi[c, t], val[c, t] = d, kh, kw, 1.0
    return w1[ci, khi, kwi] * val                   # (8, 16) float32


# ---------------------------------------------------------------------------
# Fused Pallas kernel: both MuxConv branches on one (16, H*W) lane-dense block.
# ---------------------------------------------------------------------------
def _mux_kernel(x_ref, w0_ref, w1_ref, o_ref, *, H, W):
    HW = H * W
    x = x_ref[...].astype(jnp.float32)              # (16, HW)
    w0a = w0_ref[...].astype(jnp.float32)           # (8, 9)
    w1a = w1_ref[...].astype(jnp.float32)           # (8, 16)

    x0 = x[0:8]                                     # branch-0 channels
    x1 = x[8:16]                                    # branch-1 channels
    # Phase-flipped copies (row c holds channel c^4 / c^2 / c^6): 3 sublane
    # permutes computed once and reused by all branch-1 taps.
    x1_h = jnp.concatenate([x1[4:8], x1[0:4]], axis=0)
    x1_w = jnp.concatenate([x1[2:4], x1[0:2], x1[6:8], x1[4:6]], axis=0)
    x1_hw = jnp.concatenate([x1_h[2:4], x1_h[0:2], x1_h[6:8], x1_h[4:6]], axis=0)

    # In-register 'same' padding: validity masks on the flattened lane index.
    lane = jax.lax.broadcasted_iota(jnp.int32, (1, HW), 1)
    col = lane & (W - 1)                            # W is a power of two
    h_ok = {-1: lane >= W, 0: None, 1: lane < (H - 1) * W}
    w_ok = {-1: col >= 1, 0: None, 1: col < (W - 1)}

    def tap(block, dh, dw):
        s = dh * W + dw                             # shift in flattened lanes
        v = block if s == 0 else pltpu.roll(block, shift=(-s) % HW, axis=1)
        m = h_ok[dh]
        if w_ok[dw] is not None:
            m = w_ok[dw] if m is None else jnp.logical_and(m, w_ok[dw])
        return v if m is None else jnp.where(m, v, 0.0)

    # Branch 0: plain depthwise 3x3 on channels 0..7.
    acc0 = jnp.zeros((8, HW), jnp.float32)
    for t, (kh, kw) in enumerate(_B0_TAPS):
        acc0 = acc0 + tap(x0, kh - 1, kw - 1) * w0a[:, t:t + 1]

    # Branch 1: polyphase depthwise (ChannelToSpace -> conv -> SpaceToChannel
    # folded into the coarse layout).
    blocks = {(0, 0): x1, (1, 0): x1_h, (0, 1): x1_w, (1, 1): x1_hw}
    acc1 = jnp.zeros((8, HW), jnp.float32)
    for t, (fh, dh, fw, dw) in enumerate(_B1_TAPS):
        acc1 = acc1 + tap(blocks[(fh, fw)], dh, dw) * w1a[:, t:t + 1]

    o_ref[0:8, :] = acc0.astype(o_ref.dtype)        # unmasked, lane-dense stores
    o_ref[8:16, :] = acc1.astype(o_ref.dtype)


# ---------------------------------------------------------------------------
# Public wrapper.
# ---------------------------------------------------------------------------
def mux_conv_forward(x, w0, w1):
    """MuxConv(16, 16, k=3, stride=1, padding='', scale_size=[0,1], bias=False).

    x : (N, 16, H, W) float32 NCHW
    w0: (8, 3, 3)  branch-0 depthwise filters (nn.Conv2d weight[:, 0])
    w1: (2, 3, 3)  branch-1 depthwise filters (nn.Conv2d weight[:, 0])
    """
    N, C, H, W = x.shape
    assert C == 16, "kernel specialized to in_channels = out_channels = 16"
    assert W & (W - 1) == 0 and W >= 4, "W must be a power of two"
    HW = H * W

    x_flat = x.reshape(N, C, HW)                    # free (row-major) reshape
    wb0 = w0.reshape(8, 9)
    wb1 = _build_branch1_weights(w1)                # (8, 16)

    out_flat = pl.pallas_call(
        functools.partial(_mux_kernel, H=H, W=W),
        out_shape=jax.ShapeDtypeStruct((N, C, HW), x.dtype),
        grid=(N,),
        in_specs=[
            pl.BlockSpec((None, C, HW), lambda n: (n, 0, 0)),
            pl.BlockSpec((8, 9), lambda n: (0, 0)),
            pl.BlockSpec((8, 16), lambda n: (0, 0)),
        ],
        out_specs=pl.BlockSpec((None, C, HW), lambda n: (n, 0, 0)),
        compiler_params=pltpu.CompilerParams(
            dimension_semantics=("parallel",)),
    )(x_flat, wb0, wb1)
    return out_flat.reshape(N, C, H, W)


# ---------------------------------------------------------------------------
# Pure-JAX reference (mirrors the PyTorch module) for a numerical self-check.
# ---------------------------------------------------------------------------
def _depthwise3x3_same_ref(x, w):
    N, C, H, W = x.shape
    xp = jnp.pad(x, ((0, 0), (0, 0), (1, 1), (1, 1)))
    out = jnp.zeros_like(x)
    for kh in range(3):
        for kw in range(3):
            out = out + xp[:, :, kh:kh + H, kw:kw + W] * w[:, kh, kw][None, :, None, None]
    return out


def _channel_to_space(x, bs=2):
    N, C, H, W = x.shape
    x = x.reshape(N, bs, bs, C // (bs * bs), H, W)
    x = jnp.transpose(x, (0, 3, 4, 1, 5, 2))
    return x.reshape(N, C // (bs * bs), H * bs, W * bs)


def _space_to_channel(x, bs=2):
    N, C, H, W = x.shape
    x = x.reshape(N, C, H // bs, bs, W // bs, bs)
    x = jnp.transpose(x, (0, 3, 5, 1, 2, 4))
    return x.reshape(N, C * bs * bs, H // bs, W // bs)


def mux_conv_reference(x, w0, w1):
    x0, x1 = x[:, :8], x[:, 8:]
    o0 = _depthwise3x3_same_ref(x0, w0)
    y = _channel_to_space(x1, 2)
    y = _depthwise3x3_same_ref(y, w1)
    o1 = _space_to_channel(y, 2)
    return jnp.concatenate([o0, o1], axis=1)


if __name__ == "__main__":
    key = jax.random.PRNGKey(0)
    kx, kw0, kw1 = jax.random.split(key, 3)

    N, C, H, W = 2, 16, 16, 16
    x = jax.random.normal(kx, (N, C, H, W), dtype=jnp.float32)
    # shapes match nn.Conv2d(..., groups=C).weight[:, 0, :, :]
    w0 = 0.1 * jax.random.normal(kw0, (8, 3, 3), dtype=jnp.float32)
    w1 = 0.1 * jax.random.normal(kw1, (2, 3, 3), dtype=jnp.float32)

    out = jax.jit(mux_conv_forward)(x, w0, w1)
    jax.block_until_ready(out)

    assert out.shape == (N, 16, H, W), out.shape
    assert out.dtype == jnp.float32

    ref = mux_conv_reference(x, w0, w1)
    max_err = float(jnp.max(jnp.abs(out - ref)))
    assert max_err < 1e-4, f"mismatch vs reference: {max_err}"

    print("KERNEL_OK")
</pallas_src>

<mosaic_0001>
module attributes {stable_mosaic.version = 11 : i64} {
  func.func @_mux_kernel(%arg0: i32, %arg1: memref<1x16x256xf32, #tpu.memory_space<vmem>>, %arg2: memref<8x9xf32, #tpu.memory_space<vmem>>, %arg3: memref<8x16xf32, #tpu.memory_space<vmem>>, %arg4: memref<1x16x256xf32, #tpu.memory_space<vmem>>) attributes {dimension_semantics = [#tpu.dimension_semantics<parallel>], iteration_bounds = array<i64: 2>, scalar_prefetch = 0 : i64, scratch_operands = 0 : i64, tpu.core_type = #tpu.core_type<tc>, window_params = [{transform_indices = @transform_0, window_bounds = array<i64: 1, 16, 256>}, {pipeline_mode = #tpu.pipeline_mode<synchronous>, transform_indices = @transform_1, window_bounds = array<i64: 8, 9>}, {pipeline_mode = #tpu.pipeline_mode<synchronous>, transform_indices = @transform_2, window_bounds = array<i64: 8, 16>}, {transform_indices = @transform_3, window_bounds = array<i64: 1, 16, 256>}]} {
    %c0 = arith.constant 0 : index
    %c0_0 = arith.constant 0 : index
    %c0_1 = arith.constant 0 : index
    %0 = vector.load %arg1[%c0, %c0_0, %c0_1] : memref<1x16x256xf32, #tpu.memory_space<vmem>>, vector<1x16x256xf32>
    %1 = vector.shape_cast %0 : vector<1x16x256xf32> to vector<16x256xf32>
    %c0_2 = arith.constant 0 : index
    %c0_3 = arith.constant 0 : index
    %2 = vector.load %arg2[%c0_2, %c0_3] : memref<8x9xf32, #tpu.memory_space<vmem>>, vector<8x9xf32>
    %c0_4 = arith.constant 0 : index
    %c0_5 = arith.constant 0 : index
    %3 = vector.load %arg3[%c0_4, %c0_5] : memref<8x16xf32, #tpu.memory_space<vmem>>, vector<8x16xf32>
    %4 = vector.extract_strided_slice %1 {offsets = [0, 0], sizes = [8, 256], strides = [1, 1]} : vector<16x256xf32> to vector<8x256xf32>
    %5 = vector.extract_strided_slice %1 {offsets = [8, 0], sizes = [8, 256], strides = [1, 1]} : vector<16x256xf32> to vector<8x256xf32>
    %6 = vector.extract_strided_slice %5 {offsets = [4, 0], sizes = [4, 256], strides = [1, 1]} : vector<8x256xf32> to vector<4x256xf32>
    %7 = vector.extract_strided_slice %5 {offsets = [0, 0], sizes = [4, 256], strides = [1, 1]} : vector<8x256xf32> to vector<4x256xf32>
    %8 = tpu.concatenate %6, %7 in 0 : vector<4x256xf32>, vector<4x256xf32> -> vector<8x256xf32>
    %9 = vector.extract_strided_slice %5 {offsets = [2, 0], sizes = [2, 256], strides = [1, 1]} : vector<8x256xf32> to vector<2x256xf32>
    %10 = vector.extract_strided_slice %5 {offsets = [0, 0], sizes = [2, 256], strides = [1, 1]} : vector<8x256xf32> to vector<2x256xf32>
    %11 = vector.extract_strided_slice %5 {offsets = [6, 0], sizes = [2, 256], strides = [1, 1]} : vector<8x256xf32> to vector<2x256xf32>
    %12 = vector.extract_strided_slice %5 {offsets = [4, 0], sizes = [2, 256], strides = [1, 1]} : vector<8x256xf32> to vector<2x256xf32>
    %13 = tpu.concatenate %9, %10, %11, %12 in 0 : vector<2x256xf32>, vector<2x256xf32>, vector<2x256xf32>, vector<2x256xf32> -> vector<8x256xf32>
    %14 = vector.extract_strided_slice %8 {offsets = [2, 0], sizes = [2, 256], strides = [1, 1]} : vector<8x256xf32> to vector<2x256xf32>
    %15 = vector.extract_strided_slice %8 {offsets = [0, 0], sizes = [2, 256], strides = [1, 1]} : vector<8x256xf32> to vector<2x256xf32>
    %16 = vector.extract_strided_slice %8 {offsets = [6, 0], sizes = [2, 256], strides = [1, 1]} : vector<8x256xf32> to vector<2x256xf32>
    %17 = vector.extract_strided_slice %8 {offsets = [4, 0], sizes = [2, 256], strides = [1, 1]} : vector<8x256xf32> to vector<2x256xf32>
    %18 = tpu.concatenate %14, %15, %16, %17 in 0 : vector<2x256xf32>, vector<2x256xf32>, vector<2x256xf32>, vector<2x256xf32> -> vector<8x256xf32>
    %19 = tpu.iota {dimensions = array<i32: 1>} : vector<1x256xi32>
    %c15_i32 = arith.constant 15 : i32
    %20 = vector.broadcast %c15_i32 : i32 to vector<1x256xi32>
    %21 = arith.andi %19, %20 : vector<1x256xi32>
    %c16_i32 = arith.constant 16 : i32
    %22 = vector.broadcast %c16_i32 : i32 to vector<1x256xi32>
    %23 = arith.cmpi sge, %19, %22 : vector<1x256xi32>
    %c240_i32 = arith.constant 240 : i32
    %24 = vector.broadcast %c240_i32 : i32 to vector<1x256xi32>
    %25 = arith.cmpi slt, %19, %24 : vector<1x256xi32>
    %c1_i32 = arith.constant 1 : i32
    %26 = vector.broadcast %c1_i32 : i32 to vector<1x256xi32>
    %27 = arith.cmpi sge, %21, %26 : vector<1x256xi32>
    %c15_i32_6 = arith.constant 15 : i32
    %28 = vector.broadcast %c15_i32_6 : i32 to vector<1x256xi32>
    %29 = arith.cmpi slt, %21, %28 : vector<1x256xi32>
    %cst = arith.constant 0.000000e+00 : f32
    %30 = vector.broadcast %cst : f32 to vector<8x256xf32>
    %c17_i32 = arith.constant 17 : i32
    %31 = tpu.dynamic_rotate %4 by %c17_i32 dim 1 : vector<8x256xf32>, i32 -> vector<8x256xf32>
    %32 = arith.andi %23, %27 : vector<1x256xi1>
    %cst_7 = arith.constant 0.000000e+00 : f32
    %33 = vector.shape_cast %32 : vector<1x256xi1> to vector<1x256xi1>
    %34 = vector.broadcast %33 : vector<1x256xi1> to vector<8x256xi1>
    %35 = vector.broadcast %cst_7 : f32 to vector<8x256xf32>
    %36 = arith.select %34, %31, %35 : vector<8x256xi1>, vector<8x256xf32>
    %37 = vector.extract_strided_slice %2 {offsets = [0, 0], sizes = [8, 1], strides = [1, 1]} : vector<8x9xf32> to vector<8x1xf32>
    %38 = vector.broadcast %37 : vector<8x1xf32> to vector<8x256xf32>
    %39 = arith.mulf %36, %38 : vector<8x256xf32>
    %40 = arith.addf %30, %39 : vector<8x256xf32>
    %c16_i32_8 = arith.constant 16 : i32
    %41 = tpu.dynamic_rotate %4 by %c16_i32_8 dim 1 : vector<8x256xf32>, i32 -> vector<8x256xf32>
    %cst_9 = arith.constant 0.000000e+00 : f32
    %42 = vector.shape_cast %23 : vector<1x256xi1> to vector<1x256xi1>
    %43 = vector.broadcast %42 : vector<1x256xi1> to vector<8x256xi1>
    %44 = vector.broadcast %cst_9 : f32 to vector<8x256xf32>
    %45 = arith.select %43, %41, %44 : vector<8x256xi1>, vector<8x256xf32>
    %46 = vector.extract_strided_slice %2 {offsets = [0, 1], sizes = [8, 1], strides = [1, 1]} : vector<8x9xf32> to vector<8x1xf32>
    %47 = vector.broadcast %46 : vector<8x1xf32> to vector<8x256xf32>
    %48 = arith.mulf %45, %47 : vector<8x256xf32>
    %49 = arith.addf %40, %48 : vector<8x256xf32>
    %c15_i32_10 = arith.constant 15 : i32
    %50 = tpu.dynamic_rotate %4 by %c15_i32_10 dim 1 : vector<8x256xf32>, i32 -> vector<8x256xf32>
    %51 = arith.andi %23, %29 : vector<1x256xi1>
    %cst_11 = arith.constant 0.000000e+00 : f32
    %52 = vector.shape_cast %51 : vector<1x256xi1> to vector<1x256xi1>
    %53 = vector.broadcast %52 : vector<1x256xi1> to vector<8x256xi1>
    %54 = vector.broadcast %cst_11 : f32 to vector<8x256xf32>
    %55 = arith.select %53, %50, %54 : vector<8x256xi1>, vector<8x256xf32>
    %56 = vector.extract_strided_slice %2 {offsets = [0, 2], sizes = [8, 1], strides = [1, 1]} : vector<8x9xf32> to vector<8x1xf32>
    %57 = vector.broadcast %56 : vector<8x1xf32> to vector<8x256xf32>
    %58 = arith.mulf %55, %57 : vector<8x256xf32>
    %59 = arith.addf %49, %58 : vector<8x256xf32>
    %c1_i32_12 = arith.constant 1 : i32
    %60 = tpu.dynamic_rotate %4 by %c1_i32_12 dim 1 : vector<8x256xf32>, i32 -> vector<8x256xf32>
    %cst_13 = arith.constant 0.000000e+00 : f32
    %61 = vector.shape_cast %27 : vector<1x256xi1> to vector<1x256xi1>
    %62 = vector.broadcast %61 : vector<1x256xi1> to vector<8x256xi1>
    %63 = vector.broadcast %cst_13 : f32 to vector<8x256xf32>
    %64 = arith.select %62, %60, %63 : vector<8x256xi1>, vector<8x256xf32>
    %65 = vector.extract_strided_slice %2 {offsets = [0, 3], sizes = [8, 1], strides = [1, 1]} : vector<8x9xf32> to vector<8x1xf32>
    %66 = vector.broadcast %65 : vector<8x1xf32> to vector<8x256xf32>
    %67 = arith.mulf %64, %66 : vector<8x256xf32>
    %68 = arith.addf %59, %67 : vector<8x256xf32>
    %69 = vector.extract_strided_slice %2 {offsets = [0, 4], sizes = [8, 1], strides = [1, 1]} : vector<8x9xf32> to vector<8x1xf32>
    %70 = vector.broadcast %69 : vector<8x1xf32> to vector<8x256xf32>
    %71 = arith.mulf %4, %70 : vector<8x256xf32>
    %72 = arith.addf %68, %71 : vector<8x256xf32>
    %c255_i32 = arith.constant 255 : i32
    %73 = tpu.dynamic_rotate %4 by %c255_i32 dim 1 : vector<8x256xf32>, i32 -> vector<8x256xf32>
    %cst_14 = arith.constant 0.000000e+00 : f32
    %74 = vector.shape_cast %29 : vector<1x256xi1> to vector<1x256xi1>
    %75 = vector.broadcast %74 : vector<1x256xi1> to vector<8x256xi1>
    %76 = vector.broadcast %cst_14 : f32 to vector<8x256xf32>
    %77 = arith.select %75, %73, %76 : vector<8x256xi1>, vector<8x256xf32>
    %78 = vector.extract_strided_slice %2 {offsets = [0, 5], sizes = [8, 1], strides = [1, 1]} : vector<8x9xf32> to vector<8x1xf32>
    %79 = vector.broadcast %78 : vector<8x1xf32> to vector<8x256xf32>
    %80 = arith.mulf %77, %79 : vector<8x256xf32>
    %81 = arith.addf %72, %80 : vector<8x256xf32>
    %c241_i32 = arith.constant 241 : i32
    %82 = tpu.dynamic_rotate %4 by %c241_i32 dim 1 : vector<8x256xf32>, i32 -> vector<8x256xf32>
    %83 = arith.andi %25, %27 : vector<1x256xi1>
    %cst_15 = arith.constant 0.000000e+00 : f32
    %84 = vector.shape_cast %83 : vector<1x256xi1> to vector<1x256xi1>
    %85 = vector.broadcast %84 : vector<1x256xi1> to vector<8x256xi1>
    %86 = vector.broadcast %cst_15 : f32 to vector<8x256xf32>
    %87 = arith.select %85, %82, %86 : vector<8x256xi1>, vector<8x256xf32>
    %88 = vector.extract_strided_slice %2 {offsets = [0, 6], sizes = [8, 1], strides = [1, 1]} : vector<8x9xf32> to vector<8x1xf32>
    %89 = vector.broadcast %88 : vector<8x1xf32> to vector<8x256xf32>
    %90 = arith.mulf %87, %89 : vector<8x256xf32>
    %91 = arith.addf %81, %90 : vector<8x256xf32>
    %c240_i32_16 = arith.constant 240 : i32
    %92 = tpu.dynamic_rotate %4 by %c240_i32_16 dim 1 : vector<8x256xf32>, i32 -> vector<8x256xf32>
    %cst_17 = arith.constant 0.000000e+00 : f32
    %93 = vector.shape_cast %25 : vector<1x256xi1> to vector<1x256xi1>
    %94 = vector.broadcast %93 : vector<1x256xi1> to vector<8x256xi1>
    %95 = vector.broadcast %cst_17 : f32 to vector<8x256xf32>
    %96 = arith.select %94, %92, %95 : vector<8x256xi1>, vector<8x256xf32>
    %97 = vector.extract_strided_slice %2 {offsets = [0, 7], sizes = [8, 1], strides = [1, 1]} : vector<8x9xf32> to vector<8x1xf32>
    %98 = vector.broadcast %97 : vector<8x1xf32> to vector<8x256xf32>
    %99 = arith.mulf %96, %98 : vector<8x256xf32>
    %100 = arith.addf %91, %99 : vector<8x256xf32>
    %c239_i32 = arith.constant 239 : i32
    %101 = tpu.dynamic_rotate %4 by %c239_i32 dim 1 : vector<8x256xf32>, i32 -> vector<8x256xf32>
    %102 = arith.andi %25, %29 : vector<1x256xi1>
    %cst_18 = arith.constant 0.000000e+00 : f32
    %103 = vector.shape_cast %102 : vector<1x256xi1> to vector<1x256xi1>
    %104 = vector.broadcast %103 : vector<1x256xi1> to vector<8x256xi1>
    %105 = vector.broadcast %cst_18 : f32 to vector<8x256xf32>
    %106 = arith.select %104, %101, %105 : vector<8x256xi1>, vector<8x256xf32>
    %107 = vector.extract_strided_slice %2 {offsets = [0, 8], sizes = [8, 1], strides = [1, 1]} : vector<8x9xf32> to vector<8x1xf32>
    %108 = vector.broadcast %107 : vector<8x1xf32> to vector<8x256xf32>
    %109 = arith.mulf %106, %108 : vector<8x256xf32>
    %110 = arith.addf %100, %109 : vector<8x256xf32>
    %cst_19 = arith.constant 0.000000e+00 : f32
    %111 = vector.broadcast %cst_19 : f32 to vector<8x256xf32>
    %c17_i32_20 = arith.constant 17 : i32
    %112 = tpu.dynamic_rotate %18 by %c17_i32_20 dim 1 : vector<8x256xf32>, i32 -> vector<8x256xf32>
    %113 = arith.andi %23, %27 : vector<1x256xi1>
    %cst_21 = arith.constant 0.000000e+00 : f32
    %114 = vector.shape_cast %113 : vector<1x256xi1> to vector<1x256xi1>
    %115 = vector.broadcast %114 : vector<1x256xi1> to vector<8x256xi1>
    %116 = vector.broadcast %cst_21 : f32 to vector<8x256xf32>
    %117 = arith.select %115, %112, %116 : vector<8x256xi1>, vector<8x256xf32>
    %118 = vector.extract_strided_slice %3 {offsets = [0, 0], sizes = [8, 1], strides = [1, 1]} : vector<8x16xf32> to vector<8x1xf32>
    %119 = vector.broadcast %118 : vector<8x1xf32> to vector<8x256xf32>
    %120 = arith.mulf %117, %119 : vector<8x256xf32>
    %121 = arith.addf %111, %120 : vector<8x256xf32>
    %c16_i32_22 = arith.constant 16 : i32
    %122 = tpu.dynamic_rotate %8 by %c16_i32_22 dim 1 : vector<8x256xf32>, i32 -> vector<8x256xf32>
    %cst_23 = arith.constant 0.000000e+00 : f32
    %123 = vector.shape_cast %23 : vector<1x256xi1> to vector<1x256xi1>
    %124 = vector.broadcast %123 : vector<1x256xi1> to vector<8x256xi1>
    %125 = vector.broadcast %cst_23 : f32 to vector<8x256xf32>
    %126 = arith.select %124, %122, %125 : vector<8x256xi1>, vector<8x256xf32>
    %127 = vector.extract_strided_slice %3 {offsets = [0, 1], sizes = [8, 1], strides = [1, 1]} : vector<8x16xf32> to vector<8x1xf32>
    %128 = vector.broadcast %127 : vector<8x1xf32> to vector<8x256xf32>
    %129 = arith.mulf %126, %128 : vector<8x256xf32>
    %130 = arith.addf %121, %129 : vector<8x256xf32>
    %c16_i32_24 = arith.constant 16 : i32
    %131 = tpu.dynamic_rotate %18 by %c16_i32_24 dim 1 : vector<8x256xf32>, i32 -> vector<8x256xf32>
    %cst_25 = arith.constant 0.000000e+00 : f32
    %132 = vector.shape_cast %23 : vector<1x256xi1> to vector<1x256xi1>
    %133 = vector.broadcast %132 : vector<1x256xi1> to vector<8x256xi1>
    %134 = vector.broadcast %cst_25 : f32 to vector<8x256xf32>
    %135 = arith.select %133, %131, %134 : vector<8x256xi1>, vector<8x256xf32>
    %136 = vector.extract_strided_slice %3 {offsets = [0, 2], sizes = [8, 1], strides = [1, 1]} : vector<8x16xf32> to vector<8x1xf32>
    %137 = vector.broadcast %136 : vector<8x1xf32> to vector<8x256xf32>
    %138 = arith.mulf %135, %137 : vector<8x256xf32>
    %139 = arith.addf %130, %138 : vector<8x256xf32>
    %c15_i32_26 = arith.constant 15 : i32
    %140 = tpu.dynamic_rotate %18 by %c15_i32_26 dim 1 : vector<8x256xf32>, i32 -> vector<8x256xf32>
    %141 = arith.andi %23, %29 : vector<1x256xi1>
    %cst_27 = arith.constant 0.000000e+00 : f32
    %142 = vector.shape_cast %141 : vector<1x256xi1> to vector<1x256xi1>
    %143 = vector.broadcast %142 : vector<1x256xi1> to vector<8x256xi1>
    %144 = vector.broadcast %cst_27 : f32 to vector<8x256xf32>
    %145 = arith.select %143, %140, %144 : vector<8x256xi1>, vector<8x256xf32>
    %146 = vector.extract_strided_slice %3 {offsets = [0, 3], sizes = [8, 1], strides = [1, 1]} : vector<8x16xf32> to vector<8x1xf32>
    %147 = vector.broadcast %146 : vector<8x1xf32> to vector<8x256xf32>
    %148 = arith.mulf %145, %147 : vector<8x256xf32>
    %149 = arith.addf %139, %148 : vector<8x256xf32>
    %c1_i32_28 = arith.constant 1 : i32
    %150 = tpu.dynamic_rotate %13 by %c1_i32_28 dim 1 : vector<8x256xf32>, i32 -> vector<8x256xf32>
    %cst_29 = arith.constant 0.000000e+00 : f32
    %151 = vector.shape_cast %27 : vector<1x256xi1> to vector<1x256xi1>
    %152 = vector.broadcast %151 : vector<1x256xi1> to vector<8x256xi1>
    %153 = vector.broadcast %cst_29 : f32 to vector<8x256xf32>
    %154 = arith.select %152, %150, %153 : vector<8x256xi1>, vector<8x256xf32>
    %155 = vector.extract_strided_slice %3 {offsets = [0, 4], sizes = [8, 1], strides = [1, 1]} : vector<8x16xf32> to vector<8x1xf32>
    %156 = vector.broadcast %155 : vector<8x1xf32> to vector<8x256xf32>
    %157 = arith.mulf %154, %156 : vector<8x256xf32>
    %158 = arith.addf %149, %157 : vector<8x256xf32>
    %159 = vector.extract_strided_slice %3 {offsets = [0, 5], sizes = [8, 1], strides = [1, 1]} : vector<8x16xf32> to vector<8x1xf32>
    %160 = vector.broadcast %159 : vector<8x1xf32> to vector<8x256xf32>
    %161 = arith.mulf %5, %160 : vector<8x256xf32>
    %162 = arith.addf %158, %161 : vector<8x256xf32>
    %163 = vector.extract_strided_slice %3 {offsets = [0, 6], sizes = [8, 1], strides = [1, 1]} : vector<8x16xf32> to vector<8x1xf32>
    %164 = vector.broadcast %163 : vector<8x1xf32> to vector<8x256xf32>
    %165 = arith.mulf %13, %164 : vector<8x256xf32>
    %166 = arith.addf %162, %165 : vector<8x256xf32>
    %c255_i32_30 = arith.constant 255 : i32
    %167 = tpu.dynamic_rotate %13 by %c255_i32_30 dim 1 : vector<8x256xf32>, i32 -> vector<8x256xf32>
    %cst_31 = arith.constant 0.000000e+00 : f32
    %168 = vector.shape_cast %29 : vector<1x256xi1> to vector<1x256xi1>
    %169 = vector.broadcast %168 : vector<1x256xi1> to vector<8x256xi1>
    %170 = vector.broadcast %cst_31 : f32 to vector<8x256xf32>
    %171 = arith.select %169, %167, %170 : vector<8x256xi1>, vector<8x256xf32>
    %172 = vector.extract_strided_slice %3 {offsets = [0, 7], sizes = [8, 1], strides = [1, 1]} : vector<8x16xf32> to vector<8x1xf32>
    %173 = vector.broadcast %172 : vector<8x1xf32> to vector<8x256xf32>
    %174 = arith.mulf %171, %173 : vector<8x256xf32>
    %175 = arith.addf %166, %174 : vector<8x256xf32>
    %c1_i32_32 = arith.constant 1 : i32
    %176 = tpu.dynamic_rotate %18 by %c1_i32_32 dim 1 : vector<8x256xf32>, i32 -> vector<8x256xf32>
    %cst_33 = arith.constant 0.000000e+00 : f32
    %177 = vector.shape_cast %27 : vector<1x256xi1> to vector<1x256xi1>
    %178 = vector.broadcast %177 : vector<1x256xi1> to vector<8x256xi1>
    %179 = vector.broadcast %cst_33 : f32 to vector<8x256xf32>
    %180 = arith.select %178, %176, %179 : vector<8x256xi1>, vector<8x256xf32>
    %181 = vector.extract_strided_slice %3 {offsets = [0, 8], sizes = [8, 1], strides = [1, 1]} : vector<8x16xf32> to vector<8x1xf32>
    %182 = vector.broadcast %181 : vector<8x1xf32> to vector<8x256xf32>
    %183 = arith.mulf %180, %182 : vector<8x256xf32>
    %184 = arith.addf %175, %183 : vector<8x256xf32>
    %185 = vector.extract_strided_slice %3 {offsets = [0, 9], sizes = [8, 1], strides = [1, 1]} : vector<8x16xf32> to vector<8x1xf32>
    %186 = vector.broadcast %185 : vector<8x1xf32> to vector<8x256xf32>
    %187 = arith.mulf %8, %186 : vector<8x256xf32>
    %188 = arith.addf %184, %187 : vector<8x256xf32>
    %189 = vector.extract_strided_slice %3 {offsets = [0, 10], sizes = [8, 1], strides = [1, 1]} : vector<8x16xf32> to vector<8x1xf32>
    %190 = vector.broadcast %189 : vector<8x1xf32> to vector<8x256xf32>
    %191 = arith.mulf %18, %190 : vector<8x256xf32>
    %192 = arith.addf %188, %191 : vector<8x256xf32>
    %c255_i32_34 = arith.constant 255 : i32
    %193 = tpu.dynamic_rotate %18 by %c255_i32_34 dim 1 : vector<8x256xf32>, i32 -> vector<8x256xf32>
    %cst_35 = arith.constant 0.000000e+00 : f32
    %194 = vector.shape_cast %29 : vector<1x256xi1> to vector<1x256xi1>
    %195 = vector.broadcast %194 : vector<1x256xi1> to vector<8x256xi1>
    %196 = vector.broadcast %cst_35 : f32 to vector<8x256xf32>
    %197 = arith.select %195, %193, %196 : vector<8x256xi1>, vector<8x256xf32>
    %198 = vector.extract_strided_slice %3 {offsets = [0, 11], sizes = [8, 1], strides = [1, 1]} : vector<8x16xf32> to vector<8x1xf32>
    %199 = vector.broadcast %198 : vector<8x1xf32> to vector<8x256xf32>
    %200 = arith.mulf %197, %199 : vector<8x256xf32>
    %201 = arith.addf %192, %200 : vector<8x256xf32>
    %c241_i32_36 = arith.constant 241 : i32
    %202 = tpu.dynamic_rotate %18 by %c241_i32_36 dim 1 : vector<8x256xf32>, i32 -> vector<8x256xf32>
    %203 = arith.andi %25, %27 : vector<1x256xi1>
    %cst_37 = arith.constant 0.000000e+00 : f32
    %204 = vector.shape_cast %203 : vector<1x256xi1> to vector<1x256xi1>
    %205 = vector.broadcast %204 : vector<1x256xi1> to vector<8x256xi1>
    %206 = vector.broadcast %cst_37 : f32 to vector<8x256xf32>
    %207 = arith.select %205, %202, %206 : vector<8x256xi1>, vector<8x256xf32>
    %208 = vector.extract_strided_slice %3 {offsets = [0, 12], sizes = [8, 1], strides = [1, 1]} : vector<8x16xf32> to vector<8x1xf32>
    %209 = vector.broadcast %208 : vector<8x1xf32> to vector<8x256xf32>
    %210 = arith.mulf %207, %209 : vector<8x256xf32>
    %211 = arith.addf %201, %210 : vector<8x256xf32>
    %c240_i32_38 = arith.constant 240 : i32
    %212 = tpu.dynamic_rotate %8 by %c240_i32_38 dim 1 : vector<8x256xf32>, i32 -> vector<8x256xf32>
    %cst_39 = arith.constant 0.000000e+00 : f32
    %213 = vector.shape_cast %25 : vector<1x256xi1> to vector<1x256xi1>
    %214 = vector.broadcast %213 : vector<1x256xi1> to vector<8x256xi1>
    %215 = vector.broadcast %cst_39 : f32 to vector<8x256xf32>
    %216 = arith.select %214, %212, %215 : vector<8x256xi1>, vector<8x256xf32>
    %217 = vector.extract_strided_slice %3 {offsets = [0, 13], sizes = [8, 1], strides = [1, 1]} : vector<8x16xf32> to vector<8x1xf32>
    %218 = vector.broadcast %217 : vector<8x1xf32> to vector<8x256xf32>
    %219 = arith.mulf %216, %218 : vector<8x256xf32>
    %220 = arith.addf %211, %219 : vector<8x256xf32>
    %c240_i32_40 = arith.constant 240 : i32
    %221 = tpu.dynamic_rotate %18 by %c240_i32_40 dim 1 : vector<8x256xf32>, i32 -> vector<8x256xf32>
    %cst_41 = arith.constant 0.000000e+00 : f32
    %222 = vector.shape_cast %25 : vector<1x256xi1> to vector<1x256xi1>
    %223 = vector.broadcast %222 : vector<1x256xi1> to vector<8x256xi1>
    %224 = vector.broadcast %cst_41 : f32 to vector<8x256xf32>
    %225 = arith.select %223, %221, %224 : vector<8x256xi1>, vector<8x256xf32>
    %226 = vector.extract_strided_slice %3 {offsets = [0, 14], sizes = [8, 1], strides = [1, 1]} : vector<8x16xf32> to vector<8x1xf32>
    %227 = vector.broadcast %226 : vector<8x1xf32> to vector<8x256xf32>
    %228 = arith.mulf %225, %227 : vector<8x256xf32>
    %229 = arith.addf %220, %228 : vector<8x256xf32>
    %c239_i32_42 = arith.constant 239 : i32
    %230 = tpu.dynamic_rotate %18 by %c239_i32_42 dim 1 : vector<8x256xf32>, i32 -> vector<8x256xf32>
    %231 = arith.andi %25, %29 : vector<1x256xi1>
    %cst_43 = arith.constant 0.000000e+00 : f32
    %232 = vector.shape_cast %231 : vector<1x256xi1> to vector<1x256xi1>
    %233 = vector.broadcast %232 : vector<1x256xi1> to vector<8x256xi1>
    %234 = vector.broadcast %cst_43 : f32 to vector<8x256xf32>
    %235 = arith.select %233, %230, %234 : vector<8x256xi1>, vector<8x256xf32>
    %236 = vector.extract_strided_slice %3 {offsets = [0, 15], sizes = [8, 1], strides = [1, 1]} : vector<8x16xf32> to vector<8x1xf32>
    %237 = vector.broadcast %236 : vector<8x1xf32> to vector<8x256xf32>
    %238 = arith.mulf %235, %237 : vector<8x256xf32>
    %239 = arith.addf %229, %238 : vector<8x256xf32>
    %c0_44 = arith.constant 0 : index
    %c0_45 = arith.constant 0 : index
    %c0_46 = arith.constant 0 : index
    %240 = vector.load %arg4[%c0_44, %c0_45, %c0_46] : memref<1x16x256xf32, #tpu.memory_space<vmem>>, vector<1x8x256xf32>
    %241 = vector.shape_cast %240 : vector<1x8x256xf32> to vector<8x256xf32>
    %242 = vector.shape_cast %110 : vector<8x256xf32> to vector<1x8x256xf32>
    tpu.vector_store %arg4[%c0_44, %c0_45, %c0_46], %242 {strides = array<i32>} : memref<1x16x256xf32, #tpu.memory_space<vmem>>, vector<1x8x256xf32>,
    %c0_47 = arith.constant 0 : index
    %c8 = arith.constant 8 : index
    %c0_48 = arith.constant 0 : index
    %243 = vector.load %arg4[%c0_47, %c8, %c0_48] : memref<1x16x256xf32, #tpu.memory_space<vmem>>, vector<1x8x256xf32>
    %244 = vector.shape_cast %243 : vector<1x8x256xf32> to vector<8x256xf32>
    %245 = vector.shape_cast %239 : vector<8x256xf32> to vector<1x8x256xf32>
    tpu.vector_store %arg4[%c0_47, %c8, %c0_48], %245 {strides = array<i32>} : memref<1x16x256xf32, #tpu.memory_space<vmem>>, vector<1x8x256xf32>,
    return
  }
  func.func @transform_0(%arg0: i32) -> (i32, i32, i32) {
    %c0_i32 = arith.constant 0 : i32
    %c0_i32_0 = arith.constant 0 : i32
    %c0_i32_1 = arith.constant 0 : i32
    return %arg0, %c0_i32, %c0_i32_0 : i32, i32, i32
  }
  func.func @transform_1(%arg0: i32) -> (i32, i32) {
    %c0_i32 = arith.constant 0 : i32
    %c0_i32_0 = arith.constant 0 : i32
    %c0_i32_1 = arith.constant 0 : i32
    return %c0_i32, %c0_i32_0 : i32, i32
  }
  func.func @transform_2(%arg0: i32) -> (i32, i32) {
    %c0_i32 = arith.constant 0 : i32
    %c0_i32_0 = arith.constant 0 : i32
    %c0_i32_1 = arith.constant 0 : i32
    return %c0_i32, %c0_i32_0 : i32, i32
  }
  func.func @transform_3(%arg0: i32) -> (i32, i32, i32) {
    %c0_i32 = arith.constant 0 : i32
    %c0_i32_0 = arith.constant 0 : i32
    %c0_i32_1 = arith.constant 0 : i32
    return %arg0, %c0_i32, %c0_i32_0 : i32, i32, i32
  }
}

</mosaic_0001>

<llo_original>
// kernel: mul.0
$region0: #{mul.0}
  #allocation0 [shape = 's32[1]{0}', space=sflag, size = 0x4, scoped, tag = 'scoped memory for mul.0']
  %s0 = inlined_call_operand.vmem [shape: f32[128], index: 0, kind: input, shape index: {}]
  %s1 = inlined_call_operand.vmem [shape: f32[128], index: 1, kind: input, shape index: {}]
  %s2 = inlined_call_operand.vmem [shape: f32[128], index: 2, kind: output, shape index: {}]
  %v3 = vld [vmem:[%s0] sm:$0x1]
  %v4 = vld [vmem:[%s1] sm:$0x1]
  %5 = xla_tuple %v3, %v4
  %6 = xla_tuple %5
  %v7 = vmul.f32 %v3, %v4
  %8 = xla_tuple %v7
  %9 = vst [vmem:[%s2] sm:$0x1] %v7

// kernel: mux_conv_forward.1
$region0: #{mux_conv_forward.1}
  #allocation0 [shape = 'u32[]', space=smem, size = 0x4, offset = 0x4, fixed_abs, tag = 'smem constant byte address 0x4 - core index']
  #allocation1 [shape = 'u32[144,128]{1,0:T(1,128)}', space=vmem, size = 0x12000, scoped, tag = 'internal scratch']
  %s0 = inlined_call_operand.vmem [shape: f32[2,16,256], index: 0, kind: input, shape index: {}]
  %s1 = inlined_call_operand.vmem [shape: f32[8,9], index: 1, kind: input, shape index: {}]
  %s2 = inlined_call_operand.vmem [shape: f32[8,16], index: 2, kind: input, shape index: {}]
  %s3 = inlined_call_operand.vmem [shape: f32[2,16,256], index: 3, kind: output, shape index: {}]
  %s4 = sld [smem:[#allocation0]]
  $region45: #{mux_conv_forward.1} parent=0
    _
  %s6 = ssub.s32 1, %s4
  %s7 = scalar_select 0, %s6, %s4
  loop: start=0, step=1, limit=4
  $region2: #{mux_conv_forward.1} parent=0 // loop_pre_header
    _
  $region3: #{mux_conv_forward.1} parent=0 // loop_header
    %s9 = sphi 0, %s13
    %p10 = scmp.ge.s32.totalorder %s9, 4
    %s19 = sphi 0, %s21
    %s22 = sphi 0, %s19
    %s23 = sphi 0, %s22
    %s39 = sphi 0, %s23
    %s43 = sphi 0, %s43
    %s45 = sphi 0, %s43
    %s46 = sphi 0, %s45
    %s60 = sphi 0, %s46
    %s64 = sphi 0, %s64
    %s66 = sphi 0, %s64
    %s67 = sphi 0, %s66
    %s81 = sphi 0, %s67
    %s87 = sphi 0, %s89
    %s90 = sphi 0, %s87
    %s91 = sphi 0, %s90
    %s107 = sphi 0, %s91
  $region4: #{mux_conv_forward.1} parent=0 // loop_header_branch
    %12 = sbr.rel (%p10) target = $region8
  $region5: #{mux_conv_forward.1} parent=0 // loop_body
    %s14 = ssub.s32 %s9, 1
    %s15 = ssub.s32 %s9, 2
    %s16 = sadd.s32 %s9, 1
    %s17 = ssub.s32 %s9, %s16
    %p18 = scmp.eq.s32.totalorder %s17, 0
    %s20 = sadd.s32 %s19, 1
    %s21 = scalar_select %p18, %s19, %s20
    %p24 = pneg %p18
    %p25 = scmp.eq.s32.totalorder %s9, 1
    %p26 = por %p24, %p25
    %p27 = scmp.ne.s32.totalorder %s19, %s22
    %p28 = scmp.eq.s32.totalorder %s9, 0
    %p29 = por %p27, %p28
    %p30 = scmp.ne.s32.totalorder %s19, %s22
    %p31 = scmp.eq.s32.totalorder %s14, 1
    %p32 = por %p30, %p31
    %p33 = scmp.ne.s32.totalorder %s22, %s23
    %p34 = scmp.eq.s32.totalorder %s14, 0
    %p35 = por %p33, %p34
    %p36 = scmp.ne.s32.totalorder %s22, %s23
    %p37 = scmp.eq.s32.totalorder %s15, 1
    %p38 = por %p36, %p37
    %p40 = scmp.ne.s32.totalorder %s23, %s39
    %p41 = scmp.eq.s32.totalorder %s15, 0
    %p42 = por %p40, %p41
    %s44 = sadd.s32 %s43, 1
    %p47 = scmp.eq.s32.totalorder %s9, 1
    %p48 = scmp.ne.s32.totalorder %s43, %s45
    %p49 = scmp.eq.s32.totalorder %s9, 0
    %p50 = por %p48, %p49
    %p51 = scmp.ne.s32.totalorder %s43, %s45
    %p52 = scmp.eq.s32.totalorder %s14, 1
    %p53 = por %p51, %p52
    %p54 = scmp.ne.s32.totalorder %s45, %s46
    %p55 = scmp.eq.s32.totalorder %s14, 0
    %p56 = por %p54, %p55
    %p57 = scmp.ne.s32.totalorder %s45, %s46
    %p58 = scmp.eq.s32.totalorder %s15, 1
    %p59 = por %p57, %p58
    %p61 = scmp.ne.s32.totalorder %s46, %s60
    %p62 = scmp.eq.s32.totalorder %s15, 0
    %p63 = por %p61, %p62
    %s65 = sadd.s32 %s64, 1
    %p68 = scmp.eq.s32.totalorder %s9, 1
    %p69 = scmp.ne.s32.totalorder %s64, %s66
    %p70 = scmp.eq.s32.totalorder %s9, 0
    %p71 = por %p69, %p70
    %p72 = scmp.ne.s32.totalorder %s64, %s66
    %p73 = scmp.eq.s32.totalorder %s14, 1
    %p74 = por %p72, %p73
    %p75 = scmp.ne.s32.totalorder %s66, %s67
    %p76 = scmp.eq.s32.totalorder %s14, 0
    %p77 = por %p75, %p76
    %p78 = scmp.ne.s32.totalorder %s66, %s67
    %p79 = scmp.eq.s32.totalorder %s15, 1
    %p80 = por %p78, %p79
    %p82 = scmp.ne.s32.totalorder %s67, %s81
    %p83 = scmp.eq.s32.totalorder %s15, 0
    %p84 = por %p82, %p83
    %s85 = ssub.s32 %s9, %s16
    %p86 = scmp.eq.s32.totalorder %s85, 0
    %s88 = sadd.s32 %s87, 1
    %s89 = scalar_select %p86, %s87, %s88
    %p92 = pneg %p86
    %p93 = scmp.eq.s32.totalorder %s9, 1
    %p94 = por %p92, %p93
    %p95 = scmp.ne.s32.totalorder %s87, %s90
    %p96 = scmp.eq.s32.totalorder %s9, 0
    %p97 = por %p95, %p96
    %p98 = scmp.ne.s32.totalorder %s87, %s90
    %p99 = scmp.eq.s32.totalorder %s14, 1
    %p100 = por %p98, %p99
    %p101 = scmp.ne.s32.totalorder %s90, %s91
    %p102 = scmp.eq.s32.totalorder %s14, 0
    %p103 = por %p101, %p102
    %p104 = scmp.ne.s32.totalorder %s90, %s91
    %p105 = scmp.eq.s32.totalorder %s15, 1
    %p106 = por %p104, %p105
    %p108 = scmp.ne.s32.totalorder %s91, %s107
    %p109 = scmp.eq.s32.totalorder %s15, 0
    %p110 = por %p108, %p109
    %p111 = scmp.le.s32.totalorder 1, %s9
    %p112 = scmp.lt.s32.totalorder %s9, 3
    %p113 = pnand %p111, %p112
    %p114 = pneg %p113
    // Predicated region
    $region9: #{mux_conv_forward.1} parent=5 // pred_check
      _
    $region10: #{mux_conv_forward.1} parent=5 // pred_check_branch
      %116 = sbr.rel (%p113) target = $region12
    $region11: #{mux_conv_forward.1} parent=5 // pred_region
      %s117 = ssub.s32 %s9, 1
      // Predicated region
      $region13: #{mux_conv_forward.1} parent=11 // pred_check
        %p118 = pneg %p56
      $region14: #{mux_conv_forward.1} parent=11 // pred_check_branch
        %120 = sbr.rel (%p118) target = $region16
      $region15: #{mux_conv_forward.1} parent=11 // pred_region
        _
      $region16: #{mux_conv_forward.1} parent=11 // pred_fallthru
        _
      // Predicated region
      $region17: #{mux_conv_forward.1} parent=11 // pred_check
        %p121 = pneg %p77
      $region18: #{mux_conv_forward.1} parent=11 // pred_check_branch
        %123 = sbr.rel (%p121) target = $region20
      $region19: #{mux_conv_forward.1} parent=11 // pred_region
        _
      $region20: #{mux_conv_forward.1} parent=11 // pred_fallthru
        _
    $region12: #{mux_conv_forward.1} parent=5 // pred_fallthru
      _
    %p124 = scmp.lt.s32.totalorder %s9, 2
    // Predicated region
    $region21: #{mux_conv_forward.1} parent=5 // pred_check
      %p125 = pneg %p124
    $region22: #{mux_conv_forward.1} parent=5 // pred_check_branch
      %127 = sbr.rel (%p125) target = $region24
    $region23: #{mux_conv_forward.1} parent=5 // pred_region
      // Predicated region
      $region25: #{mux_conv_forward.1} parent=23 // pred_check
        %p128 = pneg %p29
      $region26: #{mux_conv_forward.1} parent=23 // pred_check_branch
        %130 = sbr.rel (%p128) target = $region28
      $region27: #{mux_conv_forward.1} parent=23 // pred_region
        %p131 = scmp.lt.s32.totalorder %s9, 1
        %s132 = scalar_select %p131, %s9, 1
        %s133 = smul.addr %s132, 4
        %s134 = smul.addr %s133, 8
        %s135 = scalar_lea.vmem %s0, %s134
      $region28: #{mux_conv_forward.1} parent=23 // pred_fallthru
        _
    $region24: #{mux_conv_forward.1} parent=5 // pred_fallthru
      _
    %p136 = scmp.le.s32.totalorder 1, %s9
    %p137 = scmp.lt.s32.totalorder %s9, 3
    %p138 = pnand %p136, %p137
    %p139 = pneg %p138
    // Predicated region
    $region29: #{mux_conv_forward.1} parent=5 // pred_check
      _
    $region30: #{mux_conv_forward.1} parent=5 // pred_check_branch
      %141 = sbr.rel (%p138) target = $region32
    $region31: #{mux_conv_forward.1} parent=5 // pred_region
      %s142 = ssub.s32 %s9, 1
      %p143 = scmp.lt.s32.totalorder %s14, 1
      %s144 = scalar_select %p143, %s14, 1
      %s145 = smul.addr %s144, 4
      %s146 = smul.addr %s145, 8
      %s147 = scalar_lea.vmem %s0, %s146
      %p148 = pneg %p35
      %p149 = pneg %p32
      %p150 = pneg %p56
      %p151 = pneg %p53
      %p152 = pneg %p77
      %p153 = pneg %p74
      %p154 = pneg %p103
      %p155 = pneg %p100
      %p156 = scmp.lt.s32.totalorder %s14, 1
      %s157 = scalar_select %p156, %s14, 1
      %s158 = smul.addr %s157, 4
      %s159 = smul.addr %s158, 8
      %s160 = scalar_lea.vmem %s3, %s159
      %p161 = scmp.lt.s32.totalorder %s14, 1
      %s162 = scalar_select %p161, %s14, 1
      %s163 = smul.addr %s162, 4
      %s164 = smul.addr %s163, 8
      %s165 = scalar_lea.vmem %s0, %s164
      %p166 = scmp.lt.s32.totalorder %s14, 1
      %s167 = scalar_select %p166, %s14, 1
      %s168 = smul.addr %s167, 4
      %s169 = smul.addr %s168, 8
      %s170 = scalar_lea.vmem %s3, %s169
      %v171 = vld [vmem:[%s165] sm:$0xff]
      %v172 = vld [vmem:[%s165 + $0x8] sm:$0xff]
      %v173 = vld [vmem:[%s165 + $0x10] sm:$0xff]
      %v174 = vld [vmem:[%s165 + $0x18] sm:$0xff]
      %v175 = vld [vmem:[%s1] sm:$0xff]
      %v176 = vld [vmem:[%s2] sm:$0xff]
      %v179 = vrot.slane %v173, 4
      %v180 = vrot.slane %v174, 4
      %vm183 = vcmask 1043456
      %v184 = vsel %vm183, %v179, %v179
      %v185 = vsel %vm183, %v180, %v180
      %v186 = vrot.slane %v173, 2
      %v187 = vrot.slane %v174, 2
      %v190 = vrot.slane %v173, 6
      %v191 = vrot.slane %v174, 6
      %vm194 = vcmask 1041408
      %v195 = vsel %vm194, %v186, %v190
      %v196 = vsel %vm194, %v187, %v191
      %v197 = vsel %vm183, %v195, %v186
      %v198 = vsel %vm183, %v196, %v187
      %vm199 = vcmask 1045504
      %v200 = vsel %vm199, %v197, %v190
      %v201 = vsel %vm199, %v198, %v191
      %v204 = vrot.slane %v184, 2
      %v205 = vrot.slane %v185, 2
      %v208 = vrot.slane %v184, 6
      %v209 = vrot.slane %v185, 6
      %v212 = vsel %vm194, %v204, %v208
      %v213 = vsel %vm194, %v205, %v209
      %v214 = vsel %vm183, %v212, %v204
      %v215 = vsel %vm183, %v213, %v205
      %v216 = vsel %vm199, %v214, %v208
      %v217 = vsel %vm199, %v215, %v209
      %v218 = vlaneseq
      %v219 = vand.u32 %v218, 127
      %v220 = vadd.s32 %v219, 128
      %v221 = vand.u32 %v219, 15
      %v222 = vand.u32 %v220, 15
      %vm223 = vcmp.ge.s32.totalorder %v219, 16
      %vm224 = vcmp.ge.s32.totalorder %v220, 16
      %vm225 = vcmp.lt.s32.totalorder %v219, 240
      %vm226 = vcmp.lt.s32.totalorder %v220, 240
      %vm227 = vcmp.ge.s32.totalorder %v221, 1
      %vm228 = vcmp.ge.s32.totalorder %v222, 1
      %vm229 = vcmp.lt.s32.totalorder %v221, 15
      %vm230 = vcmp.lt.s32.totalorder %v222, 15
      %231 = vrot.lane.b32.xlu0 %v171, 17
      %v232 = vpop.permute.xlu0 %231
      %233 = vrot.lane.b32.xlu0 %v172, 17
      %v234 = vpop.permute.xlu0 %233
      %vm235 = vcmp.lt.s32.totalorder %v219, 17
      %v236 = vsel %vm235, %v232, %v234
      %v237 = vsel %vm235, %v234, %v232
      %vm238 = vmand %vm223, %vm227
      %vm239 = vmand %vm224, %vm228
      %v240 = vsel %vm238, 1, 0
      %v241 = vsel %vm239, 1, 0
      %vm242 = vcmp.eq.s32.totalorder %v240, 1
      %vm243 = vcmp.eq.s32.totalorder %v241, 1
      %v244 = vsel %vm242, %v237, 0.0
      %v245 = vsel %vm243, %v236, 0.0
      %247 = vset.pattern.permute.xlu0 0
      %248 = vperm.xlu0 %247, %v175
      %v249 = vpop.permute.xlu0 %248
      %v251 = vmul.f32 %v244, %v249
      %v252 = vmul.f32 %v245, %v249
      %v253 = vadd.f32 %v251, 0.0
      %v254 = vadd.f32 %v252, 0.0
      %255 = vrot.lane.b32.xlu0 %v171, 16
      %v256 = vpop.permute.xlu0 %255
      %257 = vrot.lane.b32.xlu0 %v172, 16
      %v258 = vpop.permute.xlu0 %257
      %vm259 = vcmp.lt.s32.totalorder %v219, 16
      %v260 = vsel %vm259, %v256, %v258
      %v261 = vsel %vm259, %v258, %v256
      %v262 = vsel %vm223, 1, 0
      %v263 = vsel %vm224, 1, 0
      %vm264 = vcmp.eq.s32.totalorder %v262, 1
      %vm265 = vcmp.eq.s32.totalorder %v263, 1
      %v266 = vsel %vm264, %v261, 0.0
      %v267 = vsel %vm265, %v260, 0.0
      %268 = vset.pattern.permute.xlu0 1
      %269 = vperm.xlu0 %268, %v175
      %v270 = vpop.permute.xlu0 %269
      %v272 = vmul.f32 %v266, %v270
      %v273 = vmul.f32 %v267, %v270
      %v274 = vadd.f32 %v253, %v272
      %v275 = vadd.f32 %v254, %v273
      %276 = vrot.lane.b32.xlu0 %v171, 15
      %v277 = vpop.permute.xlu0 %276
      %278 = vrot.lane.b32.xlu0 %v172, 15
      %v279 = vpop.permute.xlu0 %278
      %vm280 = vcmp.lt.s32.totalorder %v219, 15
      %v281 = vsel %vm280, %v277, %v279
      %v282 = vsel %vm280, %v279, %v277
      %vm283 = vmand %vm223, %vm229
      %vm284 = vmand %vm224, %vm230
      %v285 = vsel %vm283, 1, 0
      %v286 = vsel %vm284, 1, 0
      %vm287 = vcmp.eq.s32.totalorder %v285, 1
      %vm288 = vcmp.eq.s32.totalorder %v286, 1
      %v289 = vsel %vm287, %v282, 0.0
      %v290 = vsel %vm288, %v281, 0.0
      %291 = vset.pattern.permute.xlu0 2
      %292 = vperm.xlu0 %291, %v175
      %v293 = vpop.permute.xlu0 %292
      %v295 = vmul.f32 %v289, %v293
      %v296 = vmul.f32 %v290, %v293
      %v297 = vadd.f32 %v274, %v295
      %v298 = vadd.f32 %v275, %v296
      %299 = vrot.lane.b32.xlu0 %v171, 1
      %v300 = vpop.permute.xlu0 %299
      %301 = vrot.lane.b32.xlu0 %v172, 1
      %v302 = vpop.permute.xlu0 %301
      %vm303 = vcmp.lt.s32.totalorder %v219, 1
      %v304 = vsel %vm303, %v300, %v302
      %v305 = vsel %vm303, %v302, %v300
      %v306 = vsel %vm227, 1, 0
      %v307 = vsel %vm228, 1, 0
      %vm308 = vcmp.eq.s32.totalorder %v306, 1
      %vm309 = vcmp.eq.s32.totalorder %v307, 1
      %v310 = vsel %vm308, %v305, 0.0
      %v311 = vsel %vm309, %v304, 0.0
      %312 = vset.pattern.permute.xlu0 3
      %313 = vperm.xlu0 %312, %v175
      %v314 = vpop.permute.xlu0 %313
      %v316 = vmul.f32 %v310, %v314
      %v317 = vmul.f32 %v311, %v314
      %v318 = vadd.f32 %v297, %v316
      %v319 = vadd.f32 %v298, %v317
      %320 = vset.pattern.permute.xlu0 4
      %321 = vperm.xlu0 %320, %v175
      %v322 = vpop.permute.xlu0 %321
      %v324 = vmul.f32 %v171, %v322
      %v325 = vmul.f32 %v172, %v322
      %v326 = vadd.f32 %v318, %v324
      %v327 = vadd.f32 %v319, %v325
      %328 = vrot.lane.b32.xlu0 %v171, 127
      %v329 = vpop.permute.xlu0 %328
      %330 = vrot.lane.b32.xlu0 %v172, 127
      %v331 = vpop.permute.xlu0 %330
      %vm332 = vcmp.lt.s32.totalorder %v219, 127
      %v333 = vsel %vm332, %v329, %v331
      %v334 = vsel %vm332, %v331, %v329
      %v335 = vsel %vm229, 1, 0
      %v336 = vsel %vm230, 1, 0
      %vm337 = vcmp.eq.s32.totalorder %v335, 1
      %vm338 = vcmp.eq.s32.totalorder %v336, 1
      %v339 = vsel %vm337, %v333, 0.0
      %v340 = vsel %vm338, %v334, 0.0
      %341 = vset.pattern.permute.xlu0 5
      %342 = vperm.xlu0 %341, %v175
      %v343 = vpop.permute.xlu0 %342
      %v345 = vmul.f32 %v339, %v343
      %v346 = vmul.f32 %v340, %v343
      %v347 = vadd.f32 %v326, %v345
      %v348 = vadd.f32 %v327, %v346
      %349 = vrot.lane.b32.xlu0 %v171, 113
      %v350 = vpop.permute.xlu0 %349
      %351 = vrot.lane.b32.xlu0 %v172, 113
      %v352 = vpop.permute.xlu0 %351
      %vm353 = vcmp.lt.s32.totalorder %v219, 113
      %v354 = vsel %vm353, %v350, %v352
      %v355 = vsel %vm353, %v352, %v350
      %vm356 = vmand %vm225, %vm227
      %vm357 = vmand %vm226, %vm228
      %v358 = vsel %vm356, 1, 0
      %v359 = vsel %vm357, 1, 0
      %vm360 = vcmp.eq.s32.totalorder %v358, 1
      %vm361 = vcmp.eq.s32.totalorder %v359, 1
      %v362 = vsel %vm360, %v354, 0.0
      %v363 = vsel %vm361, %v355, 0.0
      %364 = vset.pattern.permute.xlu0 6
      %365 = vperm.xlu0 %364, %v175
      %v366 = vpop.permute.xlu0 %365
      %v368 = vmul.f32 %v362, %v366
      %v369 = vmul.f32 %v363, %v366
      %v370 = vadd.f32 %v347, %v368
      %v371 = vadd.f32 %v348, %v369
      %372 = vrot.lane.b32.xlu0 %v171, 112
      %v373 = vpop.permute.xlu0 %372
      %374 = vrot.lane.b32.xlu0 %v172, 112
      %v375 = vpop.permute.xlu0 %374
      %vm376 = vcmp.lt.s32.totalorder %v219, 112
      %v377 = vsel %vm376, %v373, %v375
      %v378 = vsel %vm376, %v375, %v373
      %v379 = vsel %vm225, 1, 0
      %v380 = vsel %vm226, 1, 0
      %vm381 = vcmp.eq.s32.totalorder %v379, 1
      %vm382 = vcmp.eq.s32.totalorder %v380, 1
      %v383 = vsel %vm381, %v377, 0.0
      %v384 = vsel %vm382, %v378, 0.0
      %385 = vset.pattern.permute.xlu0 7
      %386 = vperm.xlu0 %385, %v175
      %v387 = vpop.permute.xlu0 %386
      %v389 = vmul.f32 %v383, %v387
      %v390 = vmul.f32 %v384, %v387
      %v391 = vadd.f32 %v370, %v389
      %v392 = vadd.f32 %v371, %v390
      %393 = vrot.lane.b32.xlu0 %v171, 111
      %v394 = vpop.permute.xlu0 %393
      %395 = vrot.lane.b32.xlu0 %v172, 111
      %v396 = vpop.permute.xlu0 %395
      %vm397 = vcmp.lt.s32.totalorder %v219, 111
      %v398 = vsel %vm397, %v394, %v396
      %v399 = vsel %vm397, %v396, %v394
      %vm400 = vmand %vm225, %vm229
      %vm401 = vmand %vm226, %vm230
      %v402 = vsel %vm400, 1, 0
      %v403 = vsel %vm401, 1, 0
      %vm404 = vcmp.eq.s32.totalorder %v402, 1
      %vm405 = vcmp.eq.s32.totalorder %v403, 1
      %v406 = vsel %vm404, %v398, 0.0
      %v407 = vsel %vm405, %v399, 0.0
      %408 = vset.pattern.permute.xlu0 8
      %409 = vperm.xlu0 %408, %v175
      %v410 = vpop.permute.xlu0 %409
      %v412 = vmul.f32 %v406, %v410
      %v413 = vmul.f32 %v407, %v410
      %v414 = vadd.f32 %v391, %v412
      %v415 = vadd.f32 %v392, %v413
      %416 = vrot.lane.b32.xlu0 %v216, 17
      %v417 = vpop.permute.xlu0 %416
      %418 = vrot.lane.b32.xlu0 %v217, 17
      %v419 = vpop.permute.xlu0 %418
      %v420 = vsel %vm235, %v417, %v419
      %v421 = vsel %vm235, %v419, %v417
      %v422 = vsel %vm242, %v421, 0.0
      %v423 = vsel %vm243, %v420, 0.0
      %425 = vset.pattern.permute.xlu0 0
      %426 = vperm.xlu0 %425, %v176
      %v427 = vpop.permute.xlu0 %426
      %v429 = vmul.f32 %v422, %v427
      %v430 = vmul.f32 %v423, %v427
      %v431 = vadd.f32 %v429, 0.0
      %v432 = vadd.f32 %v430, 0.0
      %433 = vrot.lane.b32.xlu0 %v184, 16
      %v434 = vpop.permute.xlu0 %433
      %435 = vrot.lane.b32.xlu0 %v185, 16
      %v436 = vpop.permute.xlu0 %435
      %v437 = vsel %vm259, %v434, %v436
      %v438 = vsel %vm259, %v436, %v434
      %v439 = vsel %vm264, %v438, 0.0
      %v440 = vsel %vm265, %v437, 0.0
      %441 = vset.pattern.permute.xlu0 1
      %442 = vperm.xlu0 %441, %v176
      %v443 = vpop.permute.xlu0 %442
      %v445 = vmul.f32 %v439, %v443
      %v446 = vmul.f32 %v440, %v443
      %v447 = vadd.f32 %v431, %v445
      %v448 = vadd.f32 %v432, %v446
      %449 = vrot.lane.b32.xlu0 %v216, 16
      %v450 = vpop.permute.xlu0 %449
      %451 = vrot.lane.b32.xlu0 %v217, 16
      %v452 = vpop.permute.xlu0 %451
      %v453 = vsel %vm259, %v450, %v452
      %v454 = vsel %vm259, %v452, %v450
      %v455 = vsel %vm264, %v454, 0.0
      %v456 = vsel %vm265, %v453, 0.0
      %457 = vset.pattern.permute.xlu0 2
      %458 = vperm.xlu0 %457, %v176
      %v459 = vpop.permute.xlu0 %458
      %v461 = vmul.f32 %v455, %v459
      %v462 = vmul.f32 %v456, %v459
      %v463 = vadd.f32 %v447, %v461
      %v464 = vadd.f32 %v448, %v462
      %465 = vrot.lane.b32.xlu0 %v216, 15
      %v466 = vpop.permute.xlu0 %465
      %467 = vrot.lane.b32.xlu0 %v217, 15
      %v468 = vpop.permute.xlu0 %467
      %v469 = vsel %vm280, %v466, %v468
      %v470 = vsel %vm280, %v468, %v466
      %v471 = vsel %vm287, %v470, 0.0
      %v472 = vsel %vm288, %v469, 0.0
      %473 = vset.pattern.permute.xlu0 3
      %474 = vperm.xlu0 %473, %v176
      %v475 = vpop.permute.xlu0 %474
      %v477 = vmul.f32 %v471, %v475
      %v478 = vmul.f32 %v472, %v475
      %v479 = vadd.f32 %v463, %v477
      %v480 = vadd.f32 %v464, %v478
      %481 = vrot.lane.b32.xlu0 %v200, 1
      %v482 = vpop.permute.xlu0 %481
      %483 = vrot.lane.b32.xlu0 %v201, 1
      %v484 = vpop.permute.xlu0 %483
      %v485 = vsel %vm303, %v482, %v484
      %v486 = vsel %vm303, %v484, %v482
      %v487 = vsel %vm308, %v486, 0.0
      %v488 = vsel %vm309, %v485, 0.0
      %489 = vset.pattern.permute.xlu0 4
      %490 = vperm.xlu0 %489, %v176
      %v491 = vpop.permute.xlu0 %490
      %v493 = vmul.f32 %v487, %v491
      %v494 = vmul.f32 %v488, %v491
      %v495 = vadd.f32 %v479, %v493
      %v496 = vadd.f32 %v480, %v494
      %497 = vset.pattern.permute.xlu0 5
      %498 = vperm.xlu0 %497, %v176
      %v499 = vpop.permute.xlu0 %498
      %v501 = vmul.f32 %v173, %v499
      %v502 = vmul.f32 %v174, %v499
      %v503 = vadd.f32 %v495, %v501
      %v504 = vadd.f32 %v496, %v502
      %505 = vset.pattern.permute.xlu0 6
      %506 = vperm.xlu0 %505, %v176
      %v507 = vpop.permute.xlu0 %506
      %v509 = vmul.f32 %v200, %v507
      %v510 = vmul.f32 %v201, %v507
      %v511 = vadd.f32 %v503, %v509
      %v512 = vadd.f32 %v504, %v510
      %513 = vrot.lane.b32.xlu0 %v200, 127
      %v514 = vpop.permute.xlu0 %513
      %515 = vrot.lane.b32.xlu0 %v201, 127
      %v516 = vpop.permute.xlu0 %515
      %v517 = vsel %vm332, %v514, %v516
      %v518 = vsel %vm332, %v516, %v514
      %v519 = vsel %vm337, %v517, 0.0
      %v520 = vsel %vm338, %v518, 0.0
      %521 = vset.pattern.permute.xlu0 7
      %522 = vperm.xlu0 %521, %v176
      %v523 = vpop.permute.xlu0 %522
      %v525 = vmul.f32 %v519, %v523
      %v526 = vmul.f32 %v520, %v523
      %v527 = vadd.f32 %v511, %v525
      %v528 = vadd.f32 %v512, %v526
      %529 = vrot.lane.b32.xlu0 %v216, 1
      %v530 = vpop.permute.xlu0 %529
      %531 = vrot.lane.b32.xlu0 %v217, 1
      %v532 = vpop.permute.xlu0 %531
      %v533 = vsel %vm303, %v530, %v532
      %v534 = vsel %vm303, %v532, %v530
      %v535 = vsel %vm308, %v534, 0.0
      %v536 = vsel %vm309, %v533, 0.0
      %537 = vset.pattern.permute.xlu0 8
      %538 = vperm.xlu0 %537, %v176
      %v539 = vpop.permute.xlu0 %538
      %v541 = vmul.f32 %v535, %v539
      %v542 = vmul.f32 %v536, %v539
      %v543 = vadd.f32 %v527, %v541
      %v544 = vadd.f32 %v528, %v542
      %545 = vset.pattern.permute.xlu0 9
      %546 = vperm.xlu0 %545, %v176
      %v547 = vpop.permute.xlu0 %546
      %v549 = vmul.f32 %v184, %v547
      %v550 = vmul.f32 %v185, %v547
      %v551 = vadd.f32 %v543, %v549
      %v552 = vadd.f32 %v544, %v550
      %553 = vset.pattern.permute.xlu0 10
      %554 = vperm.xlu0 %553, %v176
      %v555 = vpop.permute.xlu0 %554
      %v557 = vmul.f32 %v216, %v555
      %v558 = vmul.f32 %v217, %v555
      %v559 = vadd.f32 %v551, %v557
      %v560 = vadd.f32 %v552, %v558
      %561 = vrot.lane.b32.xlu0 %v216, 127
      %v562 = vpop.permute.xlu0 %561
      %563 = vrot.lane.b32.xlu0 %v217, 127
      %v564 = vpop.permute.xlu0 %563
      %v565 = vsel %vm332, %v562, %v564
      %v566 = vsel %vm332, %v564, %v562
      %v567 = vsel %vm337, %v565, 0.0
      %v568 = vsel %vm338, %v566, 0.0
      %569 = vset.pattern.permute.xlu0 11
      %570 = vperm.xlu0 %569, %v176
      %v571 = vpop.permute.xlu0 %570
      %v573 = vmul.f32 %v567, %v571
      %v574 = vmul.f32 %v568, %v571
      %v575 = vadd.f32 %v559, %v573
      %v576 = vadd.f32 %v560, %v574
      %577 = vrot.lane.b32.xlu0 %v216, 113
      %v578 = vpop.permute.xlu0 %577
      %579 = vrot.lane.b32.xlu0 %v217, 113
      %v580 = vpop.permute.xlu0 %579
      %v581 = vsel %vm353, %v578, %v580
      %v582 = vsel %vm353, %v580, %v578
      %v583 = vsel %vm360, %v581, 0.0
      %v584 = vsel %vm361, %v582, 0.0
      %585 = vset.pattern.permute.xlu0 12
      %586 = vperm.xlu0 %585, %v176
      %v587 = vpop.permute.xlu0 %586
      %v589 = vmul.f32 %v583, %v587
      %v590 = vmul.f32 %v584, %v587
      %v591 = vadd.f32 %v575, %v589
      %v592 = vadd.f32 %v576, %v590
      %593 = vrot.lane.b32.xlu0 %v184, 112
      %v594 = vpop.permute.xlu0 %593
      %595 = vrot.lane.b32.xlu0 %v185, 112
      %v596 = vpop.permute.xlu0 %595
      %v597 = vsel %vm376, %v594, %v596
      %v598 = vsel %vm376, %v596, %v594
      %v599 = vsel %vm381, %v597, 0.0
      %v600 = vsel %vm382, %v598, 0.0
      %601 = vset.pattern.permute.xlu0 13
      %602 = vperm.xlu0 %601, %v176
      %v603 = vpop.permute.xlu0 %602
      %v605 = vmul.f32 %v599, %v603
      %v606 = vmul.f32 %v600, %v603
      %v607 = vadd.f32 %v591, %v605
      %v608 = vadd.f32 %v592, %v606
      %609 = vrot.lane.b32.xlu0 %v216, 112
      %v610 = vpop.permute.xlu0 %609
      %611 = vrot.lane.b32.xlu0 %v217, 112
      %v612 = vpop.permute.xlu0 %611
      %v613 = vsel %vm376, %v610, %v612
      %v614 = vsel %vm376, %v612, %v610
      %v615 = vsel %vm381, %v613, 0.0
      %v616 = vsel %vm382, %v614, 0.0
      %617 = vset.pattern.permute.xlu0 14
      %618 = vperm.xlu0 %617, %v176
      %v619 = vpop.permute.xlu0 %618
      %v621 = vmul.f32 %v615, %v619
      %v622 = vmul.f32 %v616, %v619
      %v623 = vadd.f32 %v607, %v621
      %v624 = vadd.f32 %v608, %v622
      %625 = vrot.lane.b32.xlu0 %v216, 111
      %v626 = vpop.permute.xlu0 %625
      %627 = vrot.lane.b32.xlu0 %v217, 111
      %v628 = vpop.permute.xlu0 %627
      %v629 = vsel %vm397, %v626, %v628
      %v630 = vsel %vm397, %v628, %v626
      %v631 = vsel %vm404, %v629, 0.0
      %v632 = vsel %vm405, %v630, 0.0
      %633 = vset.pattern.permute.xlu0 15
      %634 = vperm.xlu0 %633, %v176
      %v635 = vpop.permute.xlu0 %634
      %v637 = vmul.f32 %v631, %v635
      %v638 = vmul.f32 %v632, %v635
      %v639 = vadd.f32 %v623, %v637
      %v640 = vadd.f32 %v624, %v638
      %641 = vst [vmem:[%s170] sm:$0xff] %v414
      %642 = vst [vmem:[%s170 + $0x8] sm:$0xff] %v415
      %643 = vst [vmem:[%s170 + $0x10] sm:$0xff] %v639
      %644 = vst [vmem:[%s170 + $0x18] sm:$0xff] %v640
      %p645 = scmp.lt.s32.totalorder %s14, 1
      %s646 = scalar_select %p645, %s14, 1
      %s647 = smul.addr %s646, 4
      %s648 = smul.addr %s647, 8
      %s649 = scalar_lea.vmem %s3, %s648
      // Predicated region
      $region33: #{mux_conv_forward.1} parent=31 // pred_check
        %p650 = pneg %p100
      $region34: #{mux_conv_forward.1} parent=31 // pred_check_branch
        %652 = sbr.rel (%p650) target = $region36
      $region35: #{mux_conv_forward.1} parent=31 // pred_region
        _
      $region36: #{mux_conv_forward.1} parent=31 // pred_fallthru
        _
    $region32: #{mux_conv_forward.1} parent=5 // pred_fallthru
      _
    %p653 = scmp.le.s32.totalorder 2, %s9
    // Predicated region
    $region37: #{mux_conv_forward.1} parent=5 // pred_check
      %p654 = pneg %p653
    $region38: #{mux_conv_forward.1} parent=5 // pred_check_branch
      %656 = sbr.rel (%p654) target = $region40
    $region39: #{mux_conv_forward.1} parent=5 // pred_region
      %s657 = ssub.s32 %s9, 2
      // Predicated region
      $region41: #{mux_conv_forward.1} parent=39 // pred_check
        %p658 = pneg %p106
      $region42: #{mux_conv_forward.1} parent=39 // pred_check_branch
        %660 = sbr.rel (%p658) target = $region44
      $region43: #{mux_conv_forward.1} parent=39 // pred_region
        %p661 = scmp.lt.s32.totalorder %s15, 1
        %s662 = scalar_select %p661, %s15, 1
        %s663 = smul.addr %s662, 4
        %s664 = smul.addr %s663, 8
        %s665 = scalar_lea.vmem %s3, %s664
      $region44: #{mux_conv_forward.1} parent=39 // pred_fallthru
        _
    $region40: #{mux_conv_forward.1} parent=5 // pred_fallthru
      _
  $region6: #{mux_conv_forward.1} parent=0 // loop_footer
    %s13 = sadd.s32 1, %s9
  $region7: #{mux_conv_forward.1} parent=0 // loop_footer_branch
    %8 = sbr.rel target = $region3
  $region8: #{mux_conv_forward.1} parent=0 // loop_exit
    _

</llo_original>
